<compile_context>
chip_gen: v7x
topology: tpu7x:2x2x1
jax: 0.10.0
libtpu: 0.0.40
codegen_flags: <defaults>
</compile_context>

<pallas_src>
import jax
import jax.numpy as jnp
from jax.experimental import pallas as pl
from jax.experimental.pallas import tpu as pltpu

NEG_SLOPE = 0.01    # nn.LeakyReLU() default negative_slope


def _round_up(n, m):
    return ((n + m - 1) // m) * m


def mlp_kernel(x_ref, w1_ref, b1_ref, w2_ref, b2_ref, w3_ref, b3_ref, o_ref):
    # Small weight/bias blocks are VMEM-resident (same block index every grid step).
    b1 = b1_ref[...]                      # (1, dim_h)      f32
    b2 = b2_ref[...]                      # (1, 2*dim_h)    f32
    w3 = w3_ref[...]                      # (1, 2*dim_h)    f32 row vector (layer-3 weight)
    b3 = b3_ref[0, 0]                     # scalar from SMEM

    # Layer 1: bf16 MXU operands, f32 accumulation; epilogue in f32 on the VPU.
    x = x_ref[...]                        # (TB, dim_in)
    if x.dtype != jnp.bfloat16:
        x = x.astype(jnp.bfloat16)
    h1 = jnp.dot(x, w1_ref[...], preferred_element_type=jnp.float32) + b1
    h1 = jnp.where(h1 > 0, h1, NEG_SLOPE * h1)

    # Layer 2.
    h2 = jnp.dot(h1.astype(jnp.bfloat16), w2_ref[...],
                 preferred_element_type=jnp.float32) + b2
    h2 = jnp.where(h2 > 0, h2, NEG_SLOPE * h2)

    # Layer 3 has N=1: VPU multiply + lane reduction instead of an MXU matvec.
    y = jnp.sum(h2 * w3, axis=-1, keepdims=True) + b3          # (TB, 1) f32
    o_ref[...] = y.astype(o_ref.dtype)


def net_forward(x, params, *, block_b=4096):
    """Pallas implementation of Net(dim_in, dim_h, dim_out).forward.

    x:      (B, dim_in) float32 (or bfloat16 -- used directly, no extra cast pass)
    params: dict with w1 (dim_in, dim_h), b1 (1, dim_h),
                      w2 (dim_h, 2*dim_h), b2 (1, 2*dim_h),
                      w3 (2*dim_h, 1), b3 (1, 1)
    returns (B, 1) float32
    """
    B, dim_in = x.shape

    # Pad only to the next sublane multiple (tiny tail op; skipped when B % 8 == 0).
    padded_B = _round_up(B, 8)
    if padded_B != B:
        x = jnp.pad(x, ((0, padded_B - B), (0, 0)))

    # Batch tile: as large as requested (multiple of 8), but keep >= ~4 grid steps on big
    # batches so the "parallel" axis can shard across both v7x TensorCores.
    TB = min(block_b, padded_B)
    if padded_B > 4096 and TB * 4 > padded_B:
        TB = _round_up(pl.cdiv(padded_B, 4), 8)
    TB = min(_round_up(max(TB, 8), 8), padded_B)

    # bf16 MXU operands (tiny weights, cast once); biases and the VPU final layer stay f32.
    w1 = params["w1"].astype(jnp.bfloat16)
    w2 = params["w2"].astype(jnp.bfloat16)
    b1, b2 = params["b1"], params["b2"]
    w3t = params["w3"].reshape(1, -1)     # (1, 2*dim_h) row vector for the VPU reduce
    b3 = params["b3"].reshape(1, 1)       # true scalar -> SMEM

    grid = (pl.cdiv(padded_B, TB),)       # ragged edge block (if any) is masked by Pallas

    def resident(shape):
        # Full-array block, same block index every grid step -> stays resident in VMEM.
        return pl.BlockSpec(shape, lambda i: (0, 0))

    out = pl.pallas_call(
        mlp_kernel,
        out_shape=jax.ShapeDtypeStruct((padded_B, 1), jnp.float32),
        grid=grid,
        in_specs=[
            pl.BlockSpec((TB, dim_in), lambda i: (i, 0)),        # x: batch-tiled
            resident(w1.shape),
            resident(b1.shape),
            resident(w2.shape),
            resident(b2.shape),
            resident(w3t.shape),
            pl.BlockSpec(memory_space=pltpu.MemorySpace.SMEM),   # b3 scalar
        ],
        out_specs=pl.BlockSpec((TB, 1), lambda i: (i, 0)),       # narrow (TB, 1) output
        compiler_params=pltpu.CompilerParams(
            dimension_semantics=("parallel",),                   # megacore on v7x
        ),
    )(x, w1, b1, w2, b2, w3t, b3)

    return out[:B]


def init_params(key, dim_in, dim_h):
    """Deterministic init mimicking PyTorch nn.Linear (uniform +/- 1/sqrt(fan_in)).
    Weights stored already transposed to (in, out)."""
    def linear(key, fan_in, fan_out):
        kw, kb = jax.random.split(key)
        bound = 1.0 / jnp.sqrt(fan_in)
        w = jax.random.uniform(kw, (fan_in, fan_out), jnp.float32, -bound, bound)
        b = jax.random.uniform(kb, (1, fan_out), jnp.float32, -bound, bound)
        return w, b

    k1, k2, k3 = jax.random.split(key, 3)
    w1, b1 = linear(k1, dim_in, dim_h)
    w2, b2 = linear(k2, dim_h, dim_h * 2)
    w3, b3 = linear(k3, dim_h * 2, 1)
    return {"w1": w1, "b1": b1, "w2": w2, "b2": b2, "w3": w3, "b3": b3}


def reference_forward_f32(x, p):
    lrelu = lambda v: jnp.where(v > 0, v, NEG_SLOPE * v)
    h = lrelu(x @ p["w1"] + p["b1"])
    h = lrelu(h @ p["w2"] + p["b2"])
    return h @ p["w3"] + p["b3"]


def reference_forward_bf16(x, p):
    # Same numerics as the kernel: bf16 MXU operands, f32 accumulation, f32 epilogue.
    lrelu = lambda v: jnp.where(v > 0, v, NEG_SLOPE * v)
    h = lrelu(jnp.dot(x.astype(jnp.bfloat16), p["w1"].astype(jnp.bfloat16),
                      preferred_element_type=jnp.float32) + p["b1"])
    h = lrelu(jnp.dot(h.astype(jnp.bfloat16), p["w2"].astype(jnp.bfloat16),
                      preferred_element_type=jnp.float32) + p["b2"])
    return jnp.sum(h * p["w3"].reshape(1, -1), axis=-1, keepdims=True) + p["b3"].reshape(1, 1)


if __name__ == "__main__":
    dim_in, dim_h, dim_out = 16, 32, 1   # dim_out unused by the module's layers (final out is 1)

    key = jax.random.PRNGKey(0)
    kx, kp, kx2, kx3 = jax.random.split(key, 4)
    params = init_params(kp, dim_in, dim_h)

    # Case 1: small batch (single grid step, no padding).
    batch = 8
    x = jax.random.normal(kx, (batch, dim_in), dtype=jnp.float32)
    out = jax.block_until_ready(net_forward(x, params))
    assert out.shape == (batch, 1)
    assert jnp.allclose(out, reference_forward_bf16(x, params), atol=1e-4, rtol=1e-4), \
        "mismatch vs bf16-matched reference"
    assert jnp.allclose(out, reference_forward_f32(x, params), atol=1e-1, rtol=1e-1), \
        "mismatch vs f32 reference"

    # Case 2: batch not a multiple of the tile (exercises multi-step grid + ragged edge block).
    batch2 = 200
    x2 = jax.random.normal(kx2, (batch2, dim_in), dtype=jnp.float32)
    out2 = jax.block_until_ready(net_forward(x2, params, block_b=64))
    assert out2.shape == (batch2, 1)
    assert jnp.allclose(out2, reference_forward_bf16(x2, params), atol=1e-4, rtol=1e-4), \
        "mismatch vs bf16-matched reference (tiled)"

    # Case 3: batch not a multiple of 8 (exercises the tiny tail pad).
    batch3 = 13
    x3 = jax.random.normal(kx3, (batch3, dim_in), dtype=jnp.float32)
    out3 = jax.block_until_ready(net_forward(x3, params))
    assert out3.shape == (batch3, 1)
    assert jnp.allclose(out3, reference_forward_bf16(x3, params), atol=1e-4, rtol=1e-4), \
        "mismatch vs bf16-matched reference (tail pad)"

    print("KERNEL_OK")
</pallas_src>

<mosaic_0001>
module attributes {stable_mosaic.version = 11 : i64} {
  func.func @mlp_kernel(%arg0: i32, %arg1: memref<8x16xf32, #tpu.memory_space<vmem>>, %arg2: memref<16x32xbf16, #tpu.memory_space<vmem>>, %arg3: memref<1x32xf32, #tpu.memory_space<vmem>>, %arg4: memref<32x64xbf16, #tpu.memory_space<vmem>>, %arg5: memref<1x64xf32, #tpu.memory_space<vmem>>, %arg6: memref<1x64xf32, #tpu.memory_space<vmem>>, %arg7: memref<1x1xf32, #tpu.memory_space<smem>>, %arg8: memref<8x1xf32, #tpu.memory_space<vmem>>) attributes {dimension_semantics = [#tpu.dimension_semantics<parallel>], iteration_bounds = array<i64: 1>, scalar_prefetch = 0 : i64, scratch_operands = 0 : i64, tpu.core_type = #tpu.core_type<tc>, window_params = [{transform_indices = @transform_0, window_bounds = array<i64: 8, 16>}, {pipeline_mode = #tpu.pipeline_mode<synchronous>, transform_indices = @transform_1, window_bounds = array<i64: 16, 32>}, {pipeline_mode = #tpu.pipeline_mode<synchronous>, transform_indices = @transform_2, window_bounds = array<i64: 1, 32>}, {pipeline_mode = #tpu.pipeline_mode<synchronous>, transform_indices = @transform_3, window_bounds = array<i64: 32, 64>}, {pipeline_mode = #tpu.pipeline_mode<synchronous>, transform_indices = @transform_4, window_bounds = array<i64: 1, 64>}, {pipeline_mode = #tpu.pipeline_mode<synchronous>, transform_indices = @transform_5, window_bounds = array<i64: 1, 64>}, {transform_indices = @transform_6, window_bounds = array<i64: 1, 1>}, {transform_indices = @transform_7, window_bounds = array<i64: 8, 1>}]} {
    %c0 = arith.constant 0 : index
    %c0_0 = arith.constant 0 : index
    %0 = vector.load %arg3[%c0, %c0_0] : memref<1x32xf32, #tpu.memory_space<vmem>>, vector<1x32xf32>
    %c0_1 = arith.constant 0 : index
    %c0_2 = arith.constant 0 : index
    %1 = vector.load %arg5[%c0_1, %c0_2] : memref<1x64xf32, #tpu.memory_space<vmem>>, vector<1x64xf32>
    %c0_3 = arith.constant 0 : index
    %c0_4 = arith.constant 0 : index
    %2 = vector.load %arg6[%c0_3, %c0_4] : memref<1x64xf32, #tpu.memory_space<vmem>>, vector<1x64xf32>
    %c0_5 = arith.constant 0 : index
    %c0_6 = arith.constant 0 : index
    %3 = memref.load %arg7[%c0_5, %c0_6] : memref<1x1xf32, #tpu.memory_space<smem>>
    %c0_7 = arith.constant 0 : index
    %c0_8 = arith.constant 0 : index
    %4 = vector.load %arg1[%c0_7, %c0_8] : memref<8x16xf32, #tpu.memory_space<vmem>>, vector<8x16xf32>
    %5 = arith.truncf %4 : vector<8x16xf32> to vector<8x16xbf16>
    %c0_9 = arith.constant 0 : index
    %c0_10 = arith.constant 0 : index
    %6 = vector.load %arg2[%c0_9, %c0_10] : memref<16x32xbf16, #tpu.memory_space<vmem>>, vector<16x32xbf16>
    %cst = arith.constant dense<0.000000e+00> : vector<8x32xf32>
    %7 = tpu.matmul %5, %6, %cst {dimension_numbers = #tpu.dot_dimension_numbers<[1], [0], [0], [1], [0, 0, 1, 1], [], []>} : vector<8x16xbf16>, vector<16x32xbf16>, vector<8x32xf32> -> vector<8x32xf32>
    %8 = vector.broadcast %0 : vector<1x32xf32> to vector<8x32xf32>
    %9 = arith.addf %7, %8 : vector<8x32xf32>
    %cst_11 = arith.constant 0.000000e+00 : f32
    %10 = vector.broadcast %cst_11 : f32 to vector<8x32xf32>
    %11 = arith.cmpf ogt, %9, %10 : vector<8x32xf32>
    %cst_12 = arith.constant 0.00999999977 : f32
    %12 = vector.broadcast %cst_12 : f32 to vector<8x32xf32>
    %13 = arith.mulf %12, %9 : vector<8x32xf32>
    %14 = arith.select %11, %9, %13 : vector<8x32xi1>, vector<8x32xf32>
    %15 = arith.truncf %14 : vector<8x32xf32> to vector<8x32xbf16>
    %c0_13 = arith.constant 0 : index
    %c0_14 = arith.constant 0 : index
    %16 = vector.load %arg4[%c0_13, %c0_14] : memref<32x64xbf16, #tpu.memory_space<vmem>>, vector<32x64xbf16>
    %cst_15 = arith.constant dense<0.000000e+00> : vector<8x64xf32>
    %17 = tpu.matmul %15, %16, %cst_15 {dimension_numbers = #tpu.dot_dimension_numbers<[1], [0], [0], [1], [0, 0, 1, 1], [], []>} : vector<8x32xbf16>, vector<32x64xbf16>, vector<8x64xf32> -> vector<8x64xf32>
    %18 = vector.broadcast %1 : vector<1x64xf32> to vector<8x64xf32>
    %19 = arith.addf %17, %18 : vector<8x64xf32>
    %cst_16 = arith.constant 0.000000e+00 : f32
    %20 = vector.broadcast %cst_16 : f32 to vector<8x64xf32>
    %21 = arith.cmpf ogt, %19, %20 : vector<8x64xf32>
    %cst_17 = arith.constant 0.00999999977 : f32
    %22 = vector.broadcast %cst_17 : f32 to vector<8x64xf32>
    %23 = arith.mulf %22, %19 : vector<8x64xf32>
    %24 = arith.select %21, %19, %23 : vector<8x64xi1>, vector<8x64xf32>
    %25 = vector.broadcast %2 : vector<1x64xf32> to vector<8x64xf32>
    %26 = arith.mulf %24, %25 : vector<8x64xf32>
    %cst_18 = arith.constant dense<0.000000e+00> : vector<8xf32>
    %27 = vector.multi_reduction <add>, %26, %cst_18 [1] : vector<8x64xf32> to vector<8xf32>
    %28 = vector.shape_cast %27 : vector<8xf32> to vector<8x1xf32>
    %29 = vector.broadcast %3 : f32 to vector<8x1xf32>
    %30 = arith.addf %28, %29 : vector<8x1xf32>
    %c0_19 = arith.constant 0 : index
    %c0_20 = arith.constant 0 : index
    %31 = vector.load %arg8[%c0_19, %c0_20] : memref<8x1xf32, #tpu.memory_space<vmem>>, vector<8x1xf32>
    tpu.vector_store %arg8[%c0_19, %c0_20], %30 {strides = array<i32>} : memref<8x1xf32, #tpu.memory_space<vmem>>, vector<8x1xf32>,
    return
  }
  func.func @transform_0(%arg0: i32) -> (i32, i32) {
    %c0_i32 = arith.constant 0 : i32
    %c0_i32_0 = arith.constant 0 : i32
    return %arg0, %c0_i32 : i32, i32
  }
  func.func @transform_1(%arg0: i32) -> (i32, i32) {
    %c0_i32 = arith.constant 0 : i32
    %c0_i32_0 = arith.constant 0 : i32
    %c0_i32_1 = arith.constant 0 : i32
    return %c0_i32, %c0_i32_0 : i32, i32
  }
  func.func @transform_2(%arg0: i32) -> (i32, i32) {
    %c0_i32 = arith.constant 0 : i32
    %c0_i32_0 = arith.constant 0 : i32
    %c0_i32_1 = arith.constant 0 : i32
    return %c0_i32, %c0_i32_0 : i32, i32
  }
  func.func @transform_3(%arg0: i32) -> (i32, i32) {
    %c0_i32 = arith.constant 0 : i32
    %c0_i32_0 = arith.constant 0 : i32
    %c0_i32_1 = arith.constant 0 : i32
    return %c0_i32, %c0_i32_0 : i32, i32
  }
  func.func @transform_4(%arg0: i32) -> (i32, i32) {
    %c0_i32 = arith.constant 0 : i32
    %c0_i32_0 = arith.constant 0 : i32
    %c0_i32_1 = arith.constant 0 : i32
    return %c0_i32, %c0_i32_0 : i32, i32
  }
  func.func @transform_5(%arg0: i32) -> (i32, i32) {
    %c0_i32 = arith.constant 0 : i32
    %c0_i32_0 = arith.constant 0 : i32
    %c0_i32_1 = arith.constant 0 : i32
    return %c0_i32, %c0_i32_0 : i32, i32
  }
  func.func @transform_6(%arg0: i32) -> (i32, i32) {
    %c0_i32 = arith.constant 0 : i32
    %c0_i32_0 = arith.constant 0 : i32
    %c0_i32_1 = arith.constant 0 : i32
    return %c0_i32, %c0_i32_0 : i32, i32
  }
  func.func @transform_7(%arg0: i32) -> (i32, i32) {
    %c0_i32 = arith.constant 0 : i32
    %c0_i32_0 = arith.constant 0 : i32
    return %arg0, %c0_i32 : i32, i32
  }
}

</mosaic_0001>

<llo_original>
// kernel: tpu_custom_call.1
$region0: #{tpu_custom_call.1}
  #allocation0 [shape = 'u32[]', space=smem, size = 0x4, offset = 0x4, fixed_abs, tag = 'smem constant byte address 0x4 - core index']
  #allocation1 [shape = 'u32[144,128]{1,0:T(1,128)}', space=vmem, size = 0x12000, scoped, tag = 'internal scratch']
  #allocation2 [shape = 'f32[1,1]{1,0:T(1,128)S(6)}', space=smem, size = 0x200, scoped, tag = 'scoped memory for tpu_custom_call.1']
  %s0 = inlined_call_operand.hbm [shape: f32[8,16], index: 0, kind: input, shape index: {}]
  %s1 = inlined_call_operand.hbm [shape: bf16[16,32], index: 1, kind: input, shape index: {}]
  %s2 = inlined_call_operand.vmem [shape: f32[1,32], index: 2, kind: input, shape index: {}]
  %s3 = inlined_call_operand.hbm [shape: bf16[32,64], index: 3, kind: input, shape index: {}]
  %s4 = inlined_call_operand.vmem [shape: f32[1,64], index: 4, kind: input, shape index: {}]
  %s5 = inlined_call_operand.vmem [shape: f32[1,64], index: 5, kind: input, shape index: {}]
  %s6 = inlined_call_operand.<no memory space> [shape: f32[1,1], index: 6, kind: input, shape index: {}]
  %s7 = inlined_call_operand.vmem [shape: f32[8,1], index: 7, kind: output, shape index: {}]
  %s8 = sld [smem:[#allocation0]]
  $region50: #{tpu_custom_call.1} parent=0
    _
  %s10 = ssub.s32 1, %s8
  %s11 = scalar_select 0, %s10, %s8
  %12 = sst [smem:[#allocation2]] %s6
  $region1: #{tpu_custom_call.1} parent=0
    #allocation3 [shape = 'u8[4096]{0}', space=vmem, size = 0x1000, scoped, tag = 'input window, operand 0, single buffered']
    #allocation4 [shape = 's32[1]{0}', space=sflag, size = 0x4, scoped, tag = 'scoped memory for tpu_custom_call.1']
    #allocation5 [shape = 'u8[4096]{0}', space=vmem, size = 0x1000, scoped, tag = 'input window, operand 1, single buffered']
    #allocation6 [shape = 's32[1]{0}', space=sflag, size = 0x4, scoped, tag = 'scoped memory for tpu_custom_call.1']
    #allocation7 [shape = 'u8[8192]{0}', space=vmem, size = 0x2000, scoped, tag = 'input window, operand 3, single buffered']
    %13 = vsyncpa [#allocation4], 0
    %14 = vsyncpa [#allocation6], 0
    // Predicated region
    $region2: #{tpu_custom_call.1} parent=1 // pred_check
      _
    $region3: #{tpu_custom_call.1} parent=1 // pred_check_branch
      %16 = sbr.rel (0) target = $region5
    $region4: #{tpu_custom_call.1} parent=1 // pred_region
      %s18 = ssub.s32 128, 128
      %19 = vsyncadd [#allocation4], %s18
      %s21 = sshll.u32 [#allocation3], 4
      %s22 = int_to_ptr.vmem [resolvable:$true] %s21
      %24 = dma.hbm_to_vmem [thread:$0]  %s0, 128, %s22, [#allocation4]
    $region5: #{tpu_custom_call.1} parent=1 // pred_fallthru
      _
    // Predicated region
    $region6: #{tpu_custom_call.1} parent=1 // pred_check
      _
    $region7: #{tpu_custom_call.1} parent=1 // pred_check_branch
      %26 = sbr.rel (0) target = $region9
    $region8: #{tpu_custom_call.1} parent=1 // pred_region
      %s28 = ssub.s32 128, 128
      %29 = vsyncadd [#allocation6], %s28
      %s30 = sshll.u32 [#allocation5], 4
      %s31 = int_to_ptr.vmem [resolvable:$true] %s30
      %36 = dma.hbm_to_vmem [thread:$0]  %s1, 128, %s31, [#allocation6], 64, 64, 4
    $region9: #{tpu_custom_call.1} parent=1 // pred_fallthru
      _
    // Predicated region
    $region10: #{tpu_custom_call.1} parent=1 // pred_check
      _
    $region11: #{tpu_custom_call.1} parent=1 // pred_check_branch
      %38 = sbr.rel (0) target = $region13
    $region12: #{tpu_custom_call.1} parent=1 // pred_region
      _
    $region13: #{tpu_custom_call.1} parent=1 // pred_fallthru
      _
    // Predicated region
    $region14: #{tpu_custom_call.1} parent=1 // pred_check
      _
    $region15: #{tpu_custom_call.1} parent=1 // pred_check_branch
      %40 = sbr.rel (0) target = $region17
    $region16: #{tpu_custom_call.1} parent=1 // pred_region
      %s42 = ssub.s32 256, 256
      %43 = vsyncadd [#allocation6], %s42
      %s44 = sshll.u32 [#allocation7], 4
      %s45 = int_to_ptr.vmem [resolvable:$true] %s44
      %50 = dma.hbm_to_vmem [thread:$0]  %s3, 256, %s45, [#allocation6], 64, 64, 4
    $region17: #{tpu_custom_call.1} parent=1 // pred_fallthru
      _
    // Predicated region
    $region18: #{tpu_custom_call.1} parent=1 // pred_check
      _
    $region19: #{tpu_custom_call.1} parent=1 // pred_check_branch
      %52 = sbr.rel (0) target = $region21
    $region20: #{tpu_custom_call.1} parent=1 // pred_region
      _
    $region21: #{tpu_custom_call.1} parent=1 // pred_fallthru
      _
    // Predicated region
    $region22: #{tpu_custom_call.1} parent=1 // pred_check
      _
    $region23: #{tpu_custom_call.1} parent=1 // pred_check_branch
      %54 = sbr.rel (0) target = $region25
    $region24: #{tpu_custom_call.1} parent=1 // pred_region
      _
    $region25: #{tpu_custom_call.1} parent=1 // pred_fallthru
      _
    // Predicated region
    $region26: #{tpu_custom_call.1} parent=1 // pred_check
      _
    $region27: #{tpu_custom_call.1} parent=1 // pred_check_branch
      %56 = sbr.rel (0) target = $region29
    $region28: #{tpu_custom_call.1} parent=1 // pred_region
      _
    $region29: #{tpu_custom_call.1} parent=1 // pred_fallthru
      _
    // Predicated region
    $region30: #{tpu_custom_call.1} parent=1 // pred_check
      _
    $region31: #{tpu_custom_call.1} parent=1 // pred_check_branch
      %58 = sbr.rel (0) target = $region33
    $region32: #{tpu_custom_call.1} parent=1 // pred_region
      %59 = dma.done [#allocation4], 128
    $region33: #{tpu_custom_call.1} parent=1 // pred_fallthru
      _
    // Predicated region
    $region34: #{tpu_custom_call.1} parent=1 // pred_check
      _
    $region35: #{tpu_custom_call.1} parent=1 // pred_check_branch
      %61 = sbr.rel (0) target = $region37
    $region36: #{tpu_custom_call.1} parent=1 // pred_region
      %62 = dma.done [#allocation6], 128
    $region37: #{tpu_custom_call.1} parent=1 // pred_fallthru
      _
    // Predicated region
    $region38: #{tpu_custom_call.1} parent=1 // pred_check
      _
    $region39: #{tpu_custom_call.1} parent=1 // pred_check_branch
      %64 = sbr.rel (0) target = $region41
    $region40: #{tpu_custom_call.1} parent=1 // pred_region
      %65 = dma.done [#allocation6], 256
    $region41: #{tpu_custom_call.1} parent=1 // pred_fallthru
      _
    %v67 = vld [vmem:[%s2] sm:$0x1]
    %v68 = vld [vmem:[%s4] sm:$0x1]
    %v69 = vld [vmem:[%s5] sm:$0x1]
    %s70 = sld [smem:[#allocation2]]
    %v71 = vld [vmem:[#allocation3] sm:$0xff]
    %v72 = vpack.c.bf16 %v71, %v71
    %v73 = vld [vmem:[#allocation5] sm:$0xf]
    %v74 = vld [vmem:[#allocation5 + $0x4] sm:$0xf]
    %v76 = vlaneseq
    %v77 = vshrl.u32 %v76, 7
    %v78 = vsub.s32 0, %v77
    %v79 = vrot.slane %v67, %v78
    %v83 = vunpack.c.l.b16 %v73
    %v84 = vunpack.c.l.b16 %v74
    %v85 = vpack.c.b16 %v84, %v83
    %vm87 = vcmask 130048
    %v89 = vsel %vm87, %v72, 0
    %91 = vmatprep.subr.bf16.mxu0 0
    %92 = vmatpush1.bf16.msra.mxu0 %v85
    %93 = vmatprep.subr.bf16.mxu0 0
    %94 = vmatpush1.bf16.msra.mxu0 0
    %95 = vmatprep.subr.bf16.mxu0 0
    %96 = vmatpush1.bf16.msra.mxu0 0
    %97 = vmatprep.subr.bf16.mxu0 0
    %98 = vmatpush1.bf16.msra.mxu0 0
    %99 = vmatprep.subr.bf16.mxu0 0
    %100 = vmatpush1.bf16.msra.mxu0 0
    %101 = vmatprep.subr.bf16.mxu0 0
    %102 = vmatpush1.bf16.msra.mxu0 0
    %103 = vmatprep.subr.bf16.mxu0 0
    %104 = vmatpush1.bf16.msra.mxu0 0
    %105 = vmatprep.subr.bf16.mxu0 0
    %106 = vmatpush1.bf16.msra.mxu0 0
    %107 = vmatprep.subr.bf16.mxu0 0
    %108 = vmatpush1.bf16.msra.mxu0 0
    %109 = vmatprep.subr.bf16.mxu0 0
    %110 = vmatpush1.bf16.msra.mxu0 0
    %111 = vmatprep.subr.bf16.mxu0 0
    %112 = vmatpush1.bf16.msra.mxu0 0
    %113 = vmatprep.subr.bf16.mxu0 0
    %114 = vmatpush1.bf16.msra.mxu0 0
    %115 = vmatprep.subr.bf16.mxu0 0
    %116 = vmatpush1.bf16.msra.mxu0 0
    %117 = vmatprep.subr.bf16.mxu0 0
    %118 = vmatpush1.bf16.msra.mxu0 0
    %119 = vmatprep.subr.bf16.mxu0 0
    %120 = vmatpush1.bf16.msra.mxu0 0
    %121 = vmatprep.subr.bf16.mxu0 0
    %122 = vmatpush1.bf16.msra.mxu0 0
    %123 = vmatprep.mubr.bf16.mxu0 0
    %124 = vmatmul.mubr.bf16.gmra.mrb[0].mxu0 %v89
    %v125 = vpop.f32.mrb[0].mxu0
    %v126 = vadd.f32 %v79, %v125
    %v127 = vpop.f32.mrb[0].mxu0
    %v128 = vpop.f32.mrb[0].mxu0
    %v129 = vpop.f32.mrb[0].mxu0
    %130 = vdwg.mxu0
    %vm131 = vcmp.gt.f32.partialorder %v126, 0.0
    %v132 = vmul.f32 %v126, 0.01
    %v133 = vsel %vm131, %v126, %v132
    %v134 = vpack.c.bf16 %v133, %v133
    %v135 = vld [vmem:[#allocation7] sm:$0xf]
    %v136 = vld [vmem:[#allocation7 + $0x4] sm:$0xf]
    %v137 = vld [vmem:[#allocation7 + $0x8] sm:$0xf]
    %v138 = vld [vmem:[#allocation7 + $0xc] sm:$0xf]
    %v140 = vlaneseq
    %v141 = vshrl.u32 %v140, 7
    %v142 = vsub.s32 0, %v141
    %v143 = vrot.slane %v68, %v142
    %v149 = vunpack.c.l.b16 %v135
    %v150 = vunpack.c.l.b16 %v136
    %v151 = vunpack.c.l.b16 %v137
    %v152 = vunpack.c.l.b16 %v138
    %v153 = vpack.c.b16 %v150, %v149
    %v154 = vpack.c.b16 %v152, %v151
    %vm157 = vcmask 261120
    %v159 = vsel %vm157, %v134, 0
    %161 = vmatprep.subr.bf16.mxu0 0
    %162 = vmatpush1.bf16.msra.mxu0 %v153
    %163 = vmatprep.subr.bf16.mxu0 0
    %164 = vmatpush1.bf16.msra.mxu0 %v154
    %165 = vmatprep.subr.bf16.mxu0 0
    %166 = vmatpush1.bf16.msra.mxu0 0
    %167 = vmatprep.subr.bf16.mxu0 0
    %168 = vmatpush1.bf16.msra.mxu0 0
    %169 = vmatprep.subr.bf16.mxu0 0
    %170 = vmatpush1.bf16.msra.mxu0 0
    %171 = vmatprep.subr.bf16.mxu0 0
    %172 = vmatpush1.bf16.msra.mxu0 0
    %173 = vmatprep.subr.bf16.mxu0 0
    %174 = vmatpush1.bf16.msra.mxu0 0
    %175 = vmatprep.subr.bf16.mxu0 0
    %176 = vmatpush1.bf16.msra.mxu0 0
    %177 = vmatprep.subr.bf16.mxu0 0
    %178 = vmatpush1.bf16.msra.mxu0 0
    %179 = vmatprep.subr.bf16.mxu0 0
    %180 = vmatpush1.bf16.msra.mxu0 0
    %181 = vmatprep.subr.bf16.mxu0 0
    %182 = vmatpush1.bf16.msra.mxu0 0
    %183 = vmatprep.subr.bf16.mxu0 0
    %184 = vmatpush1.bf16.msra.mxu0 0
    %185 = vmatprep.subr.bf16.mxu0 0
    %186 = vmatpush1.bf16.msra.mxu0 0
    %187 = vmatprep.subr.bf16.mxu0 0
    %188 = vmatpush1.bf16.msra.mxu0 0
    %189 = vmatprep.subr.bf16.mxu0 0
    %190 = vmatpush1.bf16.msra.mxu0 0
    %191 = vmatprep.subr.bf16.mxu0 0
    %192 = vmatpush1.bf16.msra.mxu0 0
    %193 = vmatprep.mubr.bf16.mxu0 0
    %194 = vmatmul.mubr.bf16.gmra.mrb[0].mxu0 %v159
    %v195 = vpop.f32.mrb[0].mxu0
    %v196 = vadd.f32 %v143, %v195
    %v197 = vpop.f32.mrb[0].mxu0
    %v198 = vpop.f32.mrb[0].mxu0
    %v199 = vpop.f32.mrb[0].mxu0
    %200 = vdwg.mxu0
    %vm201 = vcmp.gt.f32.partialorder %v196, 0.0
    %v202 = vmul.f32 %v196, 0.01
    %v203 = vsel %vm201, %v196, %v202
    %v205 = vlaneseq
    %v206 = vshrl.u32 %v205, 7
    %v207 = vsub.s32 0, %v206
    %v208 = vrot.slane %v69, %v207
    %v210 = vmul.f32 %v203, %v208
    %vm211 = vcmask 523264
    %v212 = vsel %vm211, %v210, 0.0
    %213 = vadd.xlane.f32.xlu0 %v212
    %v214 = vpop.xlane.xlu0 %213
    %v215 = vstv %s70
    %v216 = vadd.f32 %v214, %v215
    %vm217 = vcmask 7168
    %218 = vst.msk [vmem:[%s7] sm:$0xff] %vm217, %v216
    // Predicated region
    $region42: #{tpu_custom_call.1} parent=1 // pred_check
      _
    $region43: #{tpu_custom_call.1} parent=1 // pred_check_branch
      %220 = sbr.rel (0) target = $region45
    $region44: #{tpu_custom_call.1} parent=1 // pred_region
      _
    $region45: #{tpu_custom_call.1} parent=1 // pred_fallthru
      _
    // Predicated region
    $region46: #{tpu_custom_call.1} parent=1 // pred_check
      _
    $region47: #{tpu_custom_call.1} parent=1 // pred_check_branch
      %222 = sbr.rel (0) target = $region49
    $region48: #{tpu_custom_call.1} parent=1 // pred_region
      _
    $region49: #{tpu_custom_call.1} parent=1 // pred_fallthru
      _
    %223 = vsyncpa [#allocation4], 1
    %224 = vsyncpa [#allocation6], 1

</llo_original>
